<compile_context>
chip_gen: v7x
topology: tpu7x:2x2x1
jax: 0.10.0
libtpu: 0.0.40
codegen_flags: <defaults>
</compile_context>

<pallas_src>
import functools

import jax
import jax.numpy as jnp
from jax import lax
from jax.experimental import pallas as pl
from jax.experimental.pallas import tpu as pltpu


def _focal_loss_kernel(logit_ref, tgt_ref, out_ref, acc_ref, *,
                       gamma, smooth, low, high, alphas, hw, hw8, needs_mask):
    """One (batch b, lane-tile t) step.

    logit_ref: (1, C, 8, T)   probabilities (any float dtype, upcast to f32)
    tgt_ref:   (1, 1, 8, T)   integer class ids (native narrow dtype)
    out_ref:   (1, 1, 1)      per-batch partial sum of +alpha*(1-pt)^g*log(pt)
                              (sign + mean/sum applied in the wrapper)
    acc_ref:   (8, T) f32     VMEM accumulator, resident across the t axis
    """
    t_i = pl.program_id(1)

    @pl.when(t_i == 0)
    def _():
        acc_ref[...] = jnp.zeros_like(acc_ref)

    num_class = logit_ref.shape[1]
    tile = logit_ref.shape[3]

    tgt = tgt_ref[0, 0].astype(jnp.int32)                      # (8, T)

    # Per-class plane loop: compare against scalar Python constants, select
    # the smoothed one-hot value, multiply by that class's probability plane
    # and accumulate.  Pure VPU work, no XLU sublane reduce, no (C, T) iota.
    pt = None
    alpha_row = None
    for c in range(num_class):
        match = tgt == c                                        # (8, T) bool
        lg = logit_ref[0, c].astype(jnp.float32)                # (8, T)
        term = jnp.where(match, high, low) * lg
        pt = term if pt is None else pt + term
        if alphas is not None:
            # alpha[target] via a select chain (exactly one class matches).
            prev = 0.0 if alpha_row is None else alpha_row
            alpha_row = jnp.where(match, float(alphas[c]), prev)

    pt = pt + smooth                                            # (8, T)
    logpt = jnp.log(pt)
    one_minus_pt = 1.0 - pt
    if float(gamma) == int(gamma):
        focal = lax.integer_pow(one_minus_pt, int(gamma))
    else:
        # guard: pt can slightly exceed 1.0 (smoothing clamp); torch would NaN
        focal = jnp.power(jnp.maximum(one_minus_pt, 0.0), gamma)

    contrib = focal * logpt                                     # (8, T)
    if alphas is not None:
        contrib = contrib * alpha_row

    if needs_mask:
        # Only emitted when HW is ragged (HW % 8 != 0 or hw8 % tile != 0).
        # select (not multiply) so NaNs from garbage/pad lanes never propagate
        row = lax.broadcasted_iota(jnp.int32, (8, tile), 0)
        col = t_i * tile + lax.broadcasted_iota(jnp.int32, (8, tile), 1)
        valid = (col < hw8) & (row * hw8 + col < hw)
        contrib = jnp.where(valid, contrib, 0.0)

    # Elementwise VPU accumulation; the cross-lane reduce happens once in the
    # per-batch epilogue below.
    acc_ref[...] += contrib

    @pl.when(t_i == pl.num_programs(1) - 1)
    def _():
        out_ref[0] = jnp.sum(acc_ref[...], keepdims=True)       # (1, 1)


def _pick_tile(hw8, num_class, logit_itemsize, tgt_itemsize, budget_bytes,
               max_tile_lanes=None):
    """Pick the lane-tile: big (amortize ~0.35us/step) but VMEM-budget safe."""
    # bytes of working set per lane column:
    #   double-buffered logits + double-buffered targets + f32 accumulator
    per_lane = (2 * num_class * 8 * logit_itemsize
                + 2 * 8 * tgt_itemsize
                + 8 * 4)
    max_tile = budget_bytes // per_lane
    if max_tile_lanes is not None:
        max_tile = min(max_tile, max_tile_lanes)
    max_tile = max(128, (max_tile // 128) * 128)                # lane-aligned
    if hw8 <= max_tile:
        return hw8, 1, per_lane                                 # full extent
    return max_tile, pl.cdiv(hw8, max_tile), per_lane


def focal_loss(logit, target, alpha=None, gamma=2, balance_index=0,
               smooth=1e-5, size_average=True,
               vmem_budget_bytes=12 << 20, max_tile_lanes=None):
    """Matches FocalLoss.forward with apply_nonlin=None (inputs = probabilities).

    logit:  (N, C, *spatial) float32 or bfloat16 probabilities
    target: (N, *spatial)    integer class ids (int8/int16/int32 all accepted;
                             kept in their native dtype through the kernel)
    """
    if smooth is None:
        smooth = 0.0
    if smooth < 0 or smooth > 1.0:
        raise ValueError("smooth must be in [0, 1]")

    n = logit.shape[0]
    num_class = logit.shape[1]

    # native layout (N, C, H, W) -> (N, C, HW); no transpose.
    logit3 = logit.reshape(n, num_class, -1)
    hw = logit3.shape[2]
    tgt3 = target.reshape(n, 1, hw)            # keep native narrow int dtype

    # view HW sublane-dense as (8, hw8); free reshape when HW % 8 == 0.
    hw8 = pl.cdiv(hw, 8)
    if hw8 * 8 != hw:
        # rare ragged case: one small pad copy; pad region is masked in-kernel
        pad = hw8 * 8 - hw
        logit3 = jnp.pad(logit3, ((0, 0), (0, 0), (0, pad)))
        tgt3 = jnp.pad(tgt3, ((0, 0), (0, 0), (0, pad)))
    logit4 = logit3.reshape(n, num_class, 8, hw8)
    tgt4 = tgt3.reshape(n, 1, 8, hw8)

    # alpha is module config -> bake per-class Python float constants.
    if alpha is None:
        alphas = None
    elif isinstance(alpha, (list, tuple)):
        if len(alpha) != num_class:
            raise ValueError("len(alpha) must equal num_class")
        s = float(sum(float(a) for a in alpha))
        alphas = tuple(float(a) / s for a in alpha)
    elif isinstance(alpha, float):
        alphas = tuple(alpha if c == balance_index else 1.0 - alpha
                       for c in range(num_class))
    else:
        raise TypeError("unsupported alpha type")

    # smoothing clamp constants; low>high degenerate case matches torch.clamp
    if smooth:
        low = smooth / (num_class - 1)
        high = 1.0 - smooth
        if low > high:
            low = high
    else:
        low, high = 0.0, 1.0

    logit_itemsize = jnp.dtype(logit4.dtype).itemsize
    tgt_itemsize = jnp.dtype(tgt4.dtype).itemsize
    tile_l, n_tiles, per_lane = _pick_tile(
        hw8, num_class, logit_itemsize, tgt_itemsize,
        vmem_budget_bytes, max_tile_lanes)
    needs_mask = (hw8 * 8 != hw) or (hw8 % tile_l != 0)

    kernel = functools.partial(
        _focal_loss_kernel,
        gamma=float(gamma), smooth=float(smooth),
        low=float(low), high=float(high), alphas=alphas,
        hw=hw, hw8=hw8, needs_mask=needs_mask)

    # scoped-VMEM limit follows the actual working set; >=32 MiB (fine on all
    # generations), capped at 48 MiB (inside v7x's 64 MiB physical VMEM).
    vmem_limit = int(min(max(per_lane * tile_l + (2 << 20), 32 << 20), 48 << 20))

    partials = pl.pallas_call(
        kernel,
        out_shape=jax.ShapeDtypeStruct((n, 1, 1), jnp.float32),
        grid_spec=pltpu.PrefetchScalarGridSpec(
            num_scalar_prefetch=0,
            grid=(n, n_tiles),
            in_specs=[
                # logits: one batch element, all classes, 8 sublanes, lane tile
                pl.BlockSpec((1, num_class, 8, tile_l),
                             lambda b, t: (b, 0, 0, t)),
                # targets: matching tile, native narrow dtype
                pl.BlockSpec((1, 1, 8, tile_l),
                             lambda b, t: (b, 0, 0, t)),
            ],
            out_specs=pl.BlockSpec((1, 1, 1), lambda b, t: (b, 0, 0)),
            scratch_shapes=[pltpu.VMEM((8, tile_l), jnp.float32)],
        ),
        compiler_params=pltpu.CompilerParams(
            # batch axis parallel (2 TCs on v7x, no-op on v5e/v6e);
            # lane-tile axis is the per-batch reduction -> arbitrary, last.
            dimension_semantics=("parallel", "arbitrary"),
            vmem_limit_bytes=vmem_limit),
    )(logit4, tgt4)

    # kernel accumulates +alpha*(1-pt)^gamma*log(pt); apply the sign and the
    # mean/sum reduction here on the tiny (N,1,1) vector.
    total = -jnp.sum(partials)
    if size_average:
        total = total / float(n * hw)
    return total


def _focal_loss_ref(logit, target, alpha=None, gamma=2, balance_index=0,
                    smooth=1e-5, size_average=True):
    """Pure-JAX reference mirroring the PyTorch forward (apply_nonlin=None)."""
    num_class = logit.shape[1]
    n = logit.shape[0]
    lg = logit.reshape(n, num_class, -1)
    lg = jnp.transpose(lg, (0, 2, 1)).reshape(-1, num_class).astype(jnp.float32)
    tgt = target.reshape(-1).astype(jnp.int32)
    one_hot = jax.nn.one_hot(tgt, num_class, dtype=jnp.float32)
    if smooth:
        one_hot = jnp.clip(one_hot, smooth / (num_class - 1), 1.0 - smooth)
    pt = jnp.sum(one_hot * lg, axis=1) + smooth
    logpt = jnp.log(pt)
    if alpha is None:
        alpha_vec = jnp.ones((num_class,), jnp.float32)
    elif isinstance(alpha, (list, tuple)):
        alpha_vec = jnp.asarray(alpha, jnp.float32)
        alpha_vec = alpha_vec / alpha_vec.sum()
    else:
        alpha_vec = jnp.full((num_class,), 1.0 - alpha, jnp.float32)
        alpha_vec = alpha_vec.at[balance_index].set(alpha)
    a = alpha_vec[tgt]
    loss = -a * (1.0 - pt) ** gamma * logpt
    return loss.mean() if size_average else loss.sum()


if __name__ == "__main__":
    key = jax.random.PRNGKey(0)
    k1, k2, k3, k4 = jax.random.split(key, 4)

    # Test 1: standard NCHW, alpha=None (gather elided), mean reduction,
    # HW % 8 == 0 -> free sublane-dense reshape, no masking, int8 targets.
    N, C, H, W = 2, 4, 16, 16
    raw = jax.random.normal(k1, (N, C, H, W), jnp.float32)
    probs = jax.nn.softmax(raw, axis=1)
    target = jax.random.randint(k2, (N, H, W), 0, C).astype(jnp.int8)

    loss = focal_loss(probs, target, alpha=None, gamma=2,
                      smooth=1e-5, size_average=True)
    loss = jax.block_until_ready(loss)
    ref = _focal_loss_ref(probs, target, None, 2, 0, 1e-5, True)
    assert jnp.allclose(loss, ref, rtol=1e-5, atol=1e-6), (loss, ref)

    # Test 2: ragged HW (1297: not a multiple of 8) forced into 128-lane tiles
    # (exercises pad + lane-OOB masking), float alpha + balance_index, sum.
    N2, C2, H2, W2 = 2, 5, 1, 1297
    raw2 = jax.random.normal(k3, (N2, C2, H2, W2), jnp.float32)
    probs2 = jax.nn.softmax(raw2, axis=1)
    target2 = jax.random.randint(k4, (N2, H2, W2), 0, C2).astype(jnp.int8)

    loss2 = focal_loss(probs2, target2, alpha=0.25, gamma=2, balance_index=1,
                       smooth=1e-5, size_average=False, max_tile_lanes=128)
    loss2 = jax.block_until_ready(loss2)
    ref2 = _focal_loss_ref(probs2, target2, 0.25, 2, 1, 1e-5, False)
    assert jnp.allclose(loss2, ref2, rtol=1e-4, atol=1e-4), (loss2, ref2)

    # Test 3: list alpha (normalized, per torch), sum reduction.
    loss3 = focal_loss(probs, target, alpha=[1.0, 2.0, 3.0, 4.0], gamma=2,
                       smooth=1e-5, size_average=False)
    loss3 = jax.block_until_ready(loss3)
    ref3 = _focal_loss_ref(probs, target, [1.0, 2.0, 3.0, 4.0], 2, 0,
                           1e-5, False)
    assert jnp.allclose(loss3, ref3, rtol=1e-4, atol=1e-5), (loss3, ref3)

    print("KERNEL_OK")
</pallas_src>

<mosaic_0001>
module attributes {stable_mosaic.version = 11 : i64} {
  func.func @_focal_loss_kernel(%arg0: i32, %arg1: i32, %arg2: memref<1x4x8x32xf32, #tpu.memory_space<vmem>>, %arg3: memref<1x1x8x32xi8, #tpu.memory_space<vmem>>, %arg4: memref<1x1x1xf32, #tpu.memory_space<vmem>>, %arg5: memref<8x32xf32, #tpu.memory_space<vmem>>) attributes {dimension_semantics = [#tpu.dimension_semantics<parallel>, #tpu.dimension_semantics<arbitrary>], iteration_bounds = array<i64: 2, 1>, scalar_prefetch = 0 : i64, scratch_operands = 1 : i64, tpu.core_type = #tpu.core_type<tc>, window_params = [{transform_indices = @transform_0, window_bounds = array<i64: 1, 4, 8, 32>}, {transform_indices = @transform_1, window_bounds = array<i64: 1, 1, 8, 32>}, {transform_indices = @transform_2, window_bounds = array<i64: 1, 1, 1>}]} {
    %c0_i32 = arith.constant 0 : i32
    %0 = arith.cmpi eq, %arg1, %c0_i32 : i32
    %1 = arith.extui %0 : i1 to i32
    %c0_i32_0 = arith.constant 0 : i32
    %2 = arith.cmpi ne, %1, %c0_i32_0 : i32
    scf.if %2 {
      %cst_33 = arith.constant 0.000000e+00 : f32
      %54 = vector.broadcast %cst_33 : f32 to vector<8x32xf32>
      %c0_34 = arith.constant 0 : index
      %c0_35 = arith.constant 0 : index
      %55 = vector.load %arg5[%c0_34, %c0_35] : memref<8x32xf32, #tpu.memory_space<vmem>>, vector<8x32xf32>
      tpu.vector_store %arg5[%c0_34, %c0_35], %54 {strides = array<i32>} : memref<8x32xf32, #tpu.memory_space<vmem>>, vector<8x32xf32>,
    } else {
    }
    %c0 = arith.constant 0 : index
    %c0_1 = arith.constant 0 : index
    %c0_2 = arith.constant 0 : index
    %c0_3 = arith.constant 0 : index
    %3 = vector.load %arg3[%c0, %c0_1, %c0_2, %c0_3] : memref<1x1x8x32xi8, #tpu.memory_space<vmem>>, vector<1x1x8x32xi8>
    %4 = vector.shape_cast %3 : vector<1x1x8x32xi8> to vector<8x32xi8>
    %5 = arith.extsi %4 : vector<8x32xi8> to vector<8x32xi32>
    %c0_i32_4 = arith.constant 0 : i32
    %6 = vector.broadcast %c0_i32_4 : i32 to vector<8x32xi32>
    %7 = arith.cmpi eq, %5, %6 : vector<8x32xi32>
    %c0_5 = arith.constant 0 : index
    %c0_6 = arith.constant 0 : index
    %c0_7 = arith.constant 0 : index
    %c0_8 = arith.constant 0 : index
    %8 = vector.load %arg2[%c0_5, %c0_6, %c0_7, %c0_8] : memref<1x4x8x32xf32, #tpu.memory_space<vmem>>, vector<1x1x8x32xf32>
    %9 = vector.shape_cast %8 : vector<1x1x8x32xf32> to vector<8x32xf32>
    %cst = arith.constant 0.999989986 : f32
    %cst_9 = arith.constant 3.33333332E-6 : f32
    %10 = vector.broadcast %cst : f32 to vector<8x32xf32>
    %11 = vector.broadcast %cst_9 : f32 to vector<8x32xf32>
    %12 = arith.select %7, %10, %11 : vector<8x32xi1>, vector<8x32xf32>
    %13 = arith.mulf %12, %9 : vector<8x32xf32>
    %c1_i32 = arith.constant 1 : i32
    %14 = vector.broadcast %c1_i32 : i32 to vector<8x32xi32>
    %15 = arith.cmpi eq, %5, %14 : vector<8x32xi32>
    %c0_10 = arith.constant 0 : index
    %c1 = arith.constant 1 : index
    %c0_11 = arith.constant 0 : index
    %c0_12 = arith.constant 0 : index
    %16 = vector.load %arg2[%c0_10, %c1, %c0_11, %c0_12] : memref<1x4x8x32xf32, #tpu.memory_space<vmem>>, vector<1x1x8x32xf32>
    %17 = vector.shape_cast %16 : vector<1x1x8x32xf32> to vector<8x32xf32>
    %cst_13 = arith.constant 0.999989986 : f32
    %cst_14 = arith.constant 3.33333332E-6 : f32
    %18 = vector.broadcast %cst_13 : f32 to vector<8x32xf32>
    %19 = vector.broadcast %cst_14 : f32 to vector<8x32xf32>
    %20 = arith.select %15, %18, %19 : vector<8x32xi1>, vector<8x32xf32>
    %21 = arith.mulf %20, %17 : vector<8x32xf32>
    %22 = arith.addf %13, %21 : vector<8x32xf32>
    %c2_i32 = arith.constant 2 : i32
    %23 = vector.broadcast %c2_i32 : i32 to vector<8x32xi32>
    %24 = arith.cmpi eq, %5, %23 : vector<8x32xi32>
    %c0_15 = arith.constant 0 : index
    %c2 = arith.constant 2 : index
    %c0_16 = arith.constant 0 : index
    %c0_17 = arith.constant 0 : index
    %25 = vector.load %arg2[%c0_15, %c2, %c0_16, %c0_17] : memref<1x4x8x32xf32, #tpu.memory_space<vmem>>, vector<1x1x8x32xf32>
    %26 = vector.shape_cast %25 : vector<1x1x8x32xf32> to vector<8x32xf32>
    %cst_18 = arith.constant 0.999989986 : f32
    %cst_19 = arith.constant 3.33333332E-6 : f32
    %27 = vector.broadcast %cst_18 : f32 to vector<8x32xf32>
    %28 = vector.broadcast %cst_19 : f32 to vector<8x32xf32>
    %29 = arith.select %24, %27, %28 : vector<8x32xi1>, vector<8x32xf32>
    %30 = arith.mulf %29, %26 : vector<8x32xf32>
    %31 = arith.addf %22, %30 : vector<8x32xf32>
    %c3_i32 = arith.constant 3 : i32
    %32 = vector.broadcast %c3_i32 : i32 to vector<8x32xi32>
    %33 = arith.cmpi eq, %5, %32 : vector<8x32xi32>
    %c0_20 = arith.constant 0 : index
    %c3 = arith.constant 3 : index
    %c0_21 = arith.constant 0 : index
    %c0_22 = arith.constant 0 : index
    %34 = vector.load %arg2[%c0_20, %c3, %c0_21, %c0_22] : memref<1x4x8x32xf32, #tpu.memory_space<vmem>>, vector<1x1x8x32xf32>
    %35 = vector.shape_cast %34 : vector<1x1x8x32xf32> to vector<8x32xf32>
    %cst_23 = arith.constant 0.999989986 : f32
    %cst_24 = arith.constant 3.33333332E-6 : f32
    %36 = vector.broadcast %cst_23 : f32 to vector<8x32xf32>
    %37 = vector.broadcast %cst_24 : f32 to vector<8x32xf32>
    %38 = arith.select %33, %36, %37 : vector<8x32xi1>, vector<8x32xf32>
    %39 = arith.mulf %38, %35 : vector<8x32xf32>
    %40 = arith.addf %31, %39 : vector<8x32xf32>
    %cst_25 = arith.constant 9.99999974E-6 : f32
    %41 = vector.broadcast %cst_25 : f32 to vector<8x32xf32>
    %42 = arith.addf %40, %41 : vector<8x32xf32>
    %43 = math.log %42 : vector<8x32xf32>
    %cst_26 = arith.constant 1.000000e+00 : f32
    %44 = vector.broadcast %cst_26 : f32 to vector<8x32xf32>
    %45 = arith.subf %44, %42 : vector<8x32xf32>
    %46 = arith.mulf %45, %45 : vector<8x32xf32>
    %47 = arith.mulf %46, %43 : vector<8x32xf32>
    %c0_27 = arith.constant 0 : index
    %c0_28 = arith.constant 0 : index
    %48 = vector.load %arg5[%c0_27, %c0_28] : memref<8x32xf32, #tpu.memory_space<vmem>>, vector<8x32xf32>
    %49 = arith.addf %48, %47 : vector<8x32xf32>
    %c0_29 = arith.constant 0 : index
    %c0_30 = arith.constant 0 : index
    %50 = vector.load %arg5[%c0_29, %c0_30] : memref<8x32xf32, #tpu.memory_space<vmem>>, vector<8x32xf32>
    tpu.vector_store %arg5[%c0_29, %c0_30], %49 {strides = array<i32>} : memref<8x32xf32, #tpu.memory_space<vmem>>, vector<8x32xf32>,
    %c0_i32_31 = arith.constant 0 : i32
    %51 = arith.cmpi eq, %arg1, %c0_i32_31 : i32
    %52 = arith.extui %51 : i1 to i32
    %c0_i32_32 = arith.constant 0 : i32
    %53 = arith.cmpi ne, %52, %c0_i32_32 : i32
    scf.if %53 {
      %c0_33 = arith.constant 0 : index
      %c0_34 = arith.constant 0 : index
      %54 = vector.load %arg5[%c0_33, %c0_34] : memref<8x32xf32, #tpu.memory_space<vmem>>, vector<8x32xf32>
      %55 = vector.shape_cast %54 : vector<8x32xf32> to vector<1x8x32xf32>
      %cst_35 = arith.constant dense<0.000000e+00> : vector<1xf32>
      %56 = vector.multi_reduction <add>, %55, %cst_35 [1, 2] : vector<1x8x32xf32> to vector<1xf32>
      %57 = vector.shape_cast %56 : vector<1xf32> to vector<1x1x1xf32>
      %58 = vector.extract %57[0, 0, 0] : f32 from vector<1x1x1xf32>
      %59 = vector.broadcast %58 : f32 to vector<1x1xf32>
      %c0_36 = arith.constant 0 : index
      %c0_37 = arith.constant 0 : index
      %c0_38 = arith.constant 0 : index
      %60 = vector.load %arg4[%c0_36, %c0_37, %c0_38] : memref<1x1x1xf32, #tpu.memory_space<vmem>>, vector<1x1x1xf32>
      %61 = vector.shape_cast %60 : vector<1x1x1xf32> to vector<1x1xf32>
      %62 = vector.shape_cast %59 : vector<1x1xf32> to vector<1x1x1xf32>
      tpu.vector_store %arg4[%c0_36, %c0_37, %c0_38], %62 {strides = array<i32>} : memref<1x1x1xf32, #tpu.memory_space<vmem>>, vector<1x1x1xf32>,
    } else {
    }
    return
  }
  func.func @transform_0(%arg0: i32, %arg1: i32) -> (i32, i32, i32, i32) {
    %c0_i32 = arith.constant 0 : i32
    %c0_i32_0 = arith.constant 0 : i32
    %c0_i32_1 = arith.constant 0 : i32
    return %arg0, %c0_i32, %c0_i32_0, %arg1 : i32, i32, i32, i32
  }
  func.func @transform_1(%arg0: i32, %arg1: i32) -> (i32, i32, i32, i32) {
    %c0_i32 = arith.constant 0 : i32
    %c0_i32_0 = arith.constant 0 : i32
    %c0_i32_1 = arith.constant 0 : i32
    return %arg0, %c0_i32, %c0_i32_0, %arg1 : i32, i32, i32, i32
  }
  func.func @transform_2(%arg0: i32, %arg1: i32) -> (i32, i32, i32) {
    %c0_i32 = arith.constant 0 : i32
    %c0_i32_0 = arith.constant 0 : i32
    %c0_i32_1 = arith.constant 0 : i32
    return %arg0, %c0_i32, %c0_i32_0 : i32, i32, i32
  }
}

</mosaic_0001>

<llo_original>
// kernel: tpu_custom_call.1
$region0: #{tpu_custom_call.1}
  #allocation0 [shape = 'u32[]', space=smem, size = 0x4, offset = 0x4, fixed_abs, tag = 'smem constant byte address 0x4 - core index']
  #allocation1 [shape = 'u32[144,128]{1,0:T(1,128)}', space=vmem, size = 0x12000, scoped, tag = 'internal scratch']
  #allocation2 [shape = 'f32[8,32]{1,0:T(8,128)}', space=vmem, size = 0x1000, scoped, tag = 'scratch operand']
  %s0 = inlined_call_operand.hbm [shape: f32[2,4,8,32], index: 0, kind: input, shape index: {}]
  %s1 = inlined_call_operand.hbm [shape: s8[2,1,8,32], index: 1, kind: input, shape index: {}]
  %s2 = inlined_call_operand.vmem [shape: f32[2,1,1], index: 2, kind: output, shape index: {}]
  %s3 = sld [smem:[#allocation0]]
  $region57: #{tpu_custom_call.1} parent=0
    _
  %s5 = ssub.s32 1, %s3
  %s6 = scalar_select 0, %s5, %s3
  $region1: #{tpu_custom_call.1} parent=0
    #allocation3 [shape = 'u8[32768]{0}', space=vmem, size = 0x8000, scoped, tag = 'input window, operand 0']
    #allocation4 [shape = 's32[2]{0}', space=sflag, size = 0x8, scoped, tag = 'scoped memory for tpu_custom_call.1']
    #allocation5 [shape = 'u8[2048]{0}', space=vmem, size = 0x800, scoped, tag = 'input window, operand 1']
    #allocation6 [shape = 's32[2]{0}', space=sflag, size = 0x8, scoped, tag = 'scoped memory for tpu_custom_call.1']
    %7 = vsyncpa [#allocation4], 0
    %s8 = scalar_lea.sflag [#allocation4], 1
    %9 = vsyncpa %s8, 0
    %10 = vsyncpa [#allocation6], 0
    %s11 = scalar_lea.sflag [#allocation6], 1
    %12 = vsyncpa %s11, 0
    loop: start=0, step=1, limit=4
    $region2: #{tpu_custom_call.1} parent=1 // loop_pre_header
      _
    $region3: #{tpu_custom_call.1} parent=1 // loop_header
      %s14 = sphi 0, %s18
      %p15 = scmp.ge.s32.totalorder %s14, 4
      %s21 = sphi 0, %s33
      %s22 = sphi 0, %s29
      %s23 = sphi 0, %s21
      %s24 = sphi 0, %s22
      %s25 = sphi 0, %s23
      %s26 = sphi 0, %s24
      %s38 = sphi 0, %s40
      %s41 = sphi 0, %s38
      %s42 = sphi 0, %s41
      %s58 = sphi 0, %s42
      %s66 = sphi 0, %s68
      %s69 = sphi 0, %s66
      %s70 = sphi 0, %s69
      %s86 = sphi 0, %s70
      %s92 = sphi 0, %s94
      %s95 = sphi 0, %s92
      %s96 = sphi 0, %s95
      %s112 = sphi 0, %s96
    $region4: #{tpu_custom_call.1} parent=1 // loop_header_branch
      %17 = sbr.rel (%p15) target = $region8
    $region5: #{tpu_custom_call.1} parent=1 // loop_body
      %s19 = ssub.s32 %s14, 1
      %s20 = ssub.s32 %s14, 2
      %s27 = sadd.s32 1, %s22
      %p28 = scmp.ge.s32.totalorder %s27, 1
      %s29 = scalar_select %p28, 0, %s27
      %s30 = sadd.s32 1, %s21
      %s31 = scalar_select %p28, %s30, %s21
      %p32 = scmp.ge.s32.totalorder %s31, 2
      %s33 = scalar_select %p32, 0, %s31
      %s34 = ssub.s32 %s21, %s33
      %s35 = ssub.s32 %s22, %s29
      %s36 = sor.u32 %s34, %s35
      %p37 = scmp.eq.s32.totalorder %s36, 0
      %s39 = sadd.s32 %s38, 1
      %s40 = scalar_select %p37, %s38, %s39
      %p43 = pneg %p37
      %p44 = scmp.eq.s32.totalorder %s14, 1
      %p45 = por %p43, %p44
      %p46 = scmp.ne.s32.totalorder %s38, %s41
      %p47 = scmp.eq.s32.totalorder %s14, 0
      %p48 = por %p46, %p47
      %p49 = scmp.ne.s32.totalorder %s38, %s41
      %p50 = scmp.eq.s32.totalorder %s19, 1
      %p51 = por %p49, %p50
      %p52 = scmp.ne.s32.totalorder %s41, %s42
      %p53 = scmp.eq.s32.totalorder %s19, 0
      %p54 = por %p52, %p53
      %p55 = scmp.ne.s32.totalorder %s41, %s42
      %p56 = scmp.eq.s32.totalorder %s20, 1
      %p57 = por %p55, %p56
      %p59 = scmp.ne.s32.totalorder %s42, %s58
      %p60 = scmp.eq.s32.totalorder %s20, 0
      %p61 = por %p59, %p60
      %s62 = ssub.s32 %s21, %s33
      %s63 = ssub.s32 %s22, %s29
      %s64 = sor.u32 %s62, %s63
      %p65 = scmp.eq.s32.totalorder %s64, 0
      %s67 = sadd.s32 %s66, 1
      %s68 = scalar_select %p65, %s66, %s67
      %p71 = pneg %p65
      %p72 = scmp.eq.s32.totalorder %s14, 1
      %p73 = por %p71, %p72
      %p74 = scmp.ne.s32.totalorder %s66, %s69
      %p75 = scmp.eq.s32.totalorder %s14, 0
      %p76 = por %p74, %p75
      %p77 = scmp.ne.s32.totalorder %s66, %s69
      %p78 = scmp.eq.s32.totalorder %s19, 1
      %p79 = por %p77, %p78
      %p80 = scmp.ne.s32.totalorder %s69, %s70
      %p81 = scmp.eq.s32.totalorder %s19, 0
      %p82 = por %p80, %p81
      %p83 = scmp.ne.s32.totalorder %s69, %s70
      %p84 = scmp.eq.s32.totalorder %s20, 1
      %p85 = por %p83, %p84
      %p87 = scmp.ne.s32.totalorder %s70, %s86
      %p88 = scmp.eq.s32.totalorder %s20, 0
      %p89 = por %p87, %p88
      %s90 = ssub.s32 %s21, %s33
      %p91 = scmp.eq.s32.totalorder %s90, 0
      %s93 = sadd.s32 %s92, 1
      %s94 = scalar_select %p91, %s92, %s93
      %p97 = pneg %p91
      %p98 = scmp.eq.s32.totalorder %s14, 1
      %p99 = por %p97, %p98
      %p100 = scmp.ne.s32.totalorder %s92, %s95
      %p101 = scmp.eq.s32.totalorder %s14, 0
      %p102 = por %p100, %p101
      %p103 = scmp.ne.s32.totalorder %s92, %s95
      %p104 = scmp.eq.s32.totalorder %s19, 1
      %p105 = por %p103, %p104
      %p106 = scmp.ne.s32.totalorder %s95, %s96
      %p107 = scmp.eq.s32.totalorder %s19, 0
      %p108 = por %p106, %p107
      %p109 = scmp.ne.s32.totalorder %s95, %s96
      %p110 = scmp.eq.s32.totalorder %s20, 1
      %p111 = por %p109, %p110
      %p113 = scmp.ne.s32.totalorder %s96, %s112
      %p114 = scmp.eq.s32.totalorder %s20, 0
      %p115 = por %p113, %p114
      %p116 = scmp.le.s32.totalorder 1, %s14
      %p117 = scmp.lt.s32.totalorder %s14, 3
      %p118 = pnand %p116, %p117
      %p119 = pneg %p118
      // Predicated region
      $region9: #{tpu_custom_call.1} parent=5 // pred_check
        _
      $region10: #{tpu_custom_call.1} parent=5 // pred_check_branch
        %121 = sbr.rel (%p118) target = $region12
      $region11: #{tpu_custom_call.1} parent=5 // pred_region
        %s122 = ssub.s32 %s14, 1
      $region12: #{tpu_custom_call.1} parent=5 // pred_fallthru
        _
      %p123 = scmp.lt.s32.totalorder %s14, 2
      // Predicated region
      $region13: #{tpu_custom_call.1} parent=5 // pred_check
        %p124 = pneg %p123
      $region14: #{tpu_custom_call.1} parent=5 // pred_check_branch
        %126 = sbr.rel (%p124) target = $region16
      $region15: #{tpu_custom_call.1} parent=5 // pred_region
        // Predicated region
        $region17: #{tpu_custom_call.1} parent=15 // pred_check
          %p127 = pneg %p48
        $region18: #{tpu_custom_call.1} parent=15 // pred_check_branch
          %129 = sbr.rel (%p127) target = $region20
        $region19: #{tpu_custom_call.1} parent=15 // pred_region
          %s130 = sand.u32 %s38, 1
          %s131 = scalar_lea.sflag [#allocation4], %s130
          %s132 = sand.u32 %s38, 1
          %s133 = smul.addr %s132, 32
          %s134 = scalar_lea.vmem [#allocation3], %s133
          %s136 = ssub.s32 512, 512
          %137 = vsyncadd %s131, %s136
          %s138 = smul.addr %s21, 4
          %s139 = sadd.s32 %s22, %s138
          %s140 = smul.addr %s139, 128
          %s141 = scalar_lea.hbm %s0, %s140
          %s142 = sshll.u32 %s134, 4
          %s143 = int_to_ptr.vmem [resolvable:$true] %s142
          %148 = dma.hbm_to_vmem [thread:$0]  %s141, 512, %s143, %s131, 128, 128, 8
        $region20: #{tpu_custom_call.1} parent=15 // pred_fallthru
          _
        // Predicated region
        $region21: #{tpu_custom_call.1} parent=15 // pred_check
          %p149 = pneg %p76
        $region22: #{tpu_custom_call.1} parent=15 // pred_check_branch
          %151 = sbr.rel (%p149) target = $region24
        $region23: #{tpu_custom_call.1} parent=15 // pred_region
          %s152 = sand.u32 %s66, 1
          %s153 = scalar_lea.sflag [#allocation6], %s152
          %s154 = sand.u32 %s66, 1
          %s155 = smul.addr %s154, 2
          %s156 = scalar_lea.vmem [#allocation5], %s155
          %s158 = ssub.s32 32, 32
          %159 = vsyncadd %s153, %s158
          %s160 = sadd.s32 %s22, %s21
          %s161 = smul.addr %s160, 32
          %s162 = scalar_lea.hbm %s1, %s161
          %s164 = sshll.u32 %s156, 4
          %s165 = int_to_ptr.vmem [resolvable:$true] %s164
          %167 = dma.hbm_to_vmem [thread:$0]  %s162, 32, %s165, %s153
        $region24: #{tpu_custom_call.1} parent=15 // pred_fallthru
          _
      $region16: #{tpu_custom_call.1} parent=5 // pred_fallthru
        _
      %p168 = scmp.le.s32.totalorder 1, %s14
      %p169 = scmp.lt.s32.totalorder %s14, 3
      %p170 = pnand %p168, %p169
      %p171 = pneg %p170
      // Predicated region
      $region25: #{tpu_custom_call.1} parent=5 // pred_check
        _
      $region26: #{tpu_custom_call.1} parent=5 // pred_check_branch
        %173 = sbr.rel (%p170) target = $region28
      $region27: #{tpu_custom_call.1} parent=5 // pred_region
        %s174 = ssub.s32 %s14, 1
        %s175 = sand.u32 %s41, 1
        %s176 = scalar_lea.sflag [#allocation4], %s175
        %s177 = sand.u32 %s41, 1
        %s178 = smul.addr %s177, 32
        %s179 = scalar_lea.vmem [#allocation3], %s178
        // Predicated region
        $region29: #{tpu_custom_call.1} parent=27 // pred_check
          %p180 = pneg %p54
        $region30: #{tpu_custom_call.1} parent=27 // pred_check_branch
          %182 = sbr.rel (%p180) target = $region32
        $region31: #{tpu_custom_call.1} parent=27 // pred_region
          %183 = dma.done %s176, 512
        $region32: #{tpu_custom_call.1} parent=27 // pred_fallthru
          _
        %s184 = sand.u32 %s69, 1
        %s185 = scalar_lea.sflag [#allocation6], %s184
        %s186 = sand.u32 %s69, 1
        %s187 = smul.addr %s186, 2
        %s188 = scalar_lea.vmem [#allocation5], %s187
        // Predicated region
        $region33: #{tpu_custom_call.1} parent=27 // pred_check
          %p189 = pneg %p82
        $region34: #{tpu_custom_call.1} parent=27 // pred_check_branch
          %191 = sbr.rel (%p189) target = $region36
        $region35: #{tpu_custom_call.1} parent=27 // pred_region
          %192 = dma.done %s185, 32
        $region36: #{tpu_custom_call.1} parent=27 // pred_fallthru
          _
        %s193 = sand.u32 %s41, 1
        %s194 = scalar_lea.sflag [#allocation4], %s193
        %s195 = sand.u32 %s41, 1
        %s196 = smul.addr %s195, 32
        %s197 = scalar_lea.vmem [#allocation3], %s196
        %p198 = pneg %p54
        %p199 = pneg %p51
        %s200 = sand.u32 %s69, 1
        %s201 = scalar_lea.sflag [#allocation6], %s200
        %s202 = sand.u32 %s69, 1
        %s203 = smul.addr %s202, 2
        %s204 = scalar_lea.vmem [#allocation5], %s203
        %p205 = pneg %p82
        %p206 = pneg %p79
        %p207 = pneg %p108
        %p208 = pneg %p105
        %p209 = scmp.lt.s32.totalorder %s23, 1
        %s210 = scalar_select %p209, %s23, 1
        %s211 = scalar_lea.vmem %s2, %s210
        %p212 = scmp.lt.s32.totalorder %s23, 1
        %s213 = scalar_select %p212, %s23, 1
        %s214 = scalar_lea.vmem %s2, %s213
        %p215 = scmp.eq.s32.totalorder %s24, 0
        // Predicated region
        $region37: #{tpu_custom_call.1} parent=27 // pred_check
          %p216 = pneg %p215
        $region38: #{tpu_custom_call.1} parent=27 // pred_check_branch
          %218 = sbr.rel (%p216) target = $region40
        $region39: #{tpu_custom_call.1} parent=27 // pred_region
          %vm219 = vcmask 261120
          %220 = vst.msk [vmem:[#allocation2] sm:$0xff] %vm219, 0.0
        $region40: #{tpu_custom_call.1} parent=27 // pred_fallthru
          _
        %v221 = vld [vmem:[%s188] sm:$0x3]
        %v222 = vunpack.c.0.s8 %v221
        %vm223 = vcmp.eq.s32.totalorder %v222, 0
        %v224 = vld [vmem:[%s179] sm:$0xff]
        %v225 = vsel %vm223, 0.99999, 3.3333333e-06
        %v226 = vmul.f32 %v225, %v224
        %vm227 = vcmp.eq.s32.totalorder %v222, 1
        %s228 = scalar_lea.vmem %s179, 8 [#allocation3]
        %v229 = vld [vmem:[%s228] sm:$0xff]
        %v230 = vsel %vm227, 0.99999, 3.3333333e-06
        %v231 = vmul.f32 %v230, %v229
        %v232 = vadd.f32 %v226, %v231
        %vm233 = vcmp.eq.s32.totalorder %v222, 2
        %s234 = scalar_lea.vmem %s179, 16 [#allocation3]
        %v235 = vld [vmem:[%s234] sm:$0xff]
        %v236 = vsel %vm233, 0.99999, 3.3333333e-06
        %v237 = vmul.f32 %v236, %v235
        %v238 = vadd.f32 %v232, %v237
        %vm239 = vcmp.eq.s32.totalorder %v222, 3
        %s240 = scalar_lea.vmem %s179, 24 [#allocation3]
        %v241 = vld [vmem:[%s240] sm:$0xff]
        %v242 = vsel %vm239, 0.99999, 3.3333333e-06
        %v243 = vmul.f32 %v242, %v241
        %v244 = vadd.f32 %v238, %v243
        %v245 = vadd.f32 %v244, 1e-05
        %v246 = vlog2.pop %v245
        %v247 = vmul.f32 %v246, 0.6931472
        %v248 = vsub.f32 1.0, %v245
        %v249 = vmul.f32 %v248, %v248
        %v250 = vmul.f32 %v249, %v247
        %v251 = vld [vmem:[#allocation2] sm:$0xff]
        %v252 = vadd.f32 %v251, %v250
        %vm253 = vcmask 261120
        %254 = vst.msk [vmem:[#allocation2] sm:$0xff] %vm253, %v252
        // Predicated region
        $region41: #{tpu_custom_call.1} parent=27 // pred_check
          %p255 = pneg %p215
        $region42: #{tpu_custom_call.1} parent=27 // pred_check_branch
          %257 = sbr.rel (%p255) target = $region44
        $region43: #{tpu_custom_call.1} parent=27 // pred_region
          %v258 = vld [vmem:[#allocation2] sm:$0xff]
          %v259 = vsel %vm253, %v258, 0.0
          %260 = vadd.xlane.f32.xlu0 %v259
          %v261 = vpop.xlane.xlu0 %260
          %v262 = vrot.slane %v261, 4
          %v263 = vadd.f32 %v261, %v262
          %v264 = vrot.slane %v263, 2
          %v265 = vadd.f32 %v263, %v264
          %v266 = vrot.slane %v265, 1
          %v267 = vadd.f32 %v265, %v266
          %s268 = vtos %v267
          %v269 = vstv %s268
          %vm270 = vcmask 0
          %271 = vst.msk [vmem:[%s214] sm:$0x1] %vm270, %v269
        $region44: #{tpu_custom_call.1} parent=27 // pred_fallthru
          _
        %p272 = scmp.lt.s32.totalorder %s23, 1
        %s273 = scalar_select %p272, %s23, 1
        %s274 = scalar_lea.vmem %s2, %s273
        // Predicated region
        $region45: #{tpu_custom_call.1} parent=27 // pred_check
          %p275 = pneg %p105
        $region46: #{tpu_custom_call.1} parent=27 // pred_check_branch
          %277 = sbr.rel (%p275) target = $region48
        $region47: #{tpu_custom_call.1} parent=27 // pred_region
          _
        $region48: #{tpu_custom_call.1} parent=27 // pred_fallthru
          _
      $region28: #{tpu_custom_call.1} parent=5 // pred_fallthru
        _
      %p278 = scmp.le.s32.totalorder 2, %s14
      // Predicated region
      $region49: #{tpu_custom_call.1} parent=5 // pred_check
        %p279 = pneg %p278
      $region50: #{tpu_custom_call.1} parent=5 // pred_check_branch
        %281 = sbr.rel (%p279) target = $region52
      $region51: #{tpu_custom_call.1} parent=5 // pred_region
        %s282 = ssub.s32 %s14, 2
        // Predicated region
        $region53: #{tpu_custom_call.1} parent=51 // pred_check
          %p283 = pneg %p111
        $region54: #{tpu_custom_call.1} parent=51 // pred_check_branch
          %285 = sbr.rel (%p283) target = $region56
        $region55: #{tpu_custom_call.1} parent=51 // pred_region
          %p286 = scmp.lt.s32.totalorder %s25, 1
          %s287 = scalar_select %p286, %s25, 1
          %s288 = scalar_lea.vmem %s2, %s287
        $region56: #{tpu_custom_call.1} parent=51 // pred_fallthru
          _
      $region52: #{tpu_custom_call.1} parent=5 // pred_fallthru
        _
    $region6: #{tpu_custom_call.1} parent=1 // loop_footer
      %s18 = sadd.s32 1, %s14
    $region7: #{tpu_custom_call.1} parent=1 // loop_footer_branch
      %13 = sbr.rel target = $region3
    $region8: #{tpu_custom_call.1} parent=1 // loop_exit
      _
    %289 = vsyncpa [#allocation4], 1
    %s290 = scalar_lea.sflag [#allocation4], 1
    %291 = vsyncpa %s290, 1
    %292 = vsyncpa [#allocation6], 1
    %s293 = scalar_lea.sflag [#allocation6], 1
    %294 = vsyncpa %s293, 1

</llo_original>
